<compile_context>
chip_gen: v5e
topology: v5e:2x2
jax: 0.10.0
libtpu: 0.0.40
codegen_flags: <defaults>
</compile_context>

<pallas_src>
import functools

import jax
import jax.numpy as jnp
from jax import lax
from jax.experimental import pallas as pl
from jax.experimental.pallas import tpu as pltpu


# ------------------------------ fused kernel --------------------------------

def _inverted_block_kernel(*refs, expand, stride, use_res, H, W, lp):
    it = iter(refs)
    x_ref = next(it)                              # (1, Cin, H*W)
    if expand:
        w_exp_ref = next(it)                      # (hidden, Cin)   BN scale folded
        b_exp_ref = next(it)                      # (hidden, 1)
    w_dw_ref = next(it)                           # (hidden, 9)     BN scale folded
    b_dw_ref = next(it)                           # (hidden, 1)
    mask_ref = next(it)                           # (2, H*W)  [dj=0 valid, dj=2 valid]
    w_pr_ref = next(it)                           # (Cout, hidden)  BN scale folded
    b_pr_ref = next(it)                           # (Cout, 1)
    sub_ref = next(it) if stride == 2 else None   # (H*W, Ho*Wo) one-hot selector
    out_ref = next(it)                            # (1, Cout, Ho*Wo)
    hpad_ref = next(it)                           # VMEM scratch (hidden, lp+H*W+W+1) f32

    P = H * W
    x = x_ref[0]                                  # (Cin, H*W) f32, lanes = spatial

    # --- 1x1 expand conv (+ folded BN) + bias + ReLU6 ---------------------------
    if expand:
        h = jnp.dot(w_exp_ref[...], x.astype(w_exp_ref.dtype),
                    preferred_element_type=jnp.float32)
        h = jnp.clip(h + b_exp_ref[...], 0.0, 6.0)
    else:
        h = x

    # --- stage hidden activation in the zero-padded VMEM scratch (never in HBM) --
    # Only the W+1 border columns that the 3x3 taps actually read are zeroed.
    hid = hpad_ref.shape[0]
    zcol = jnp.zeros((hid, W + 1), jnp.float32)
    hpad_ref[:, lp - (W + 1):lp] = zcol           # left zero border (read by top taps)
    hpad_ref[:, lp + P:] = zcol                   # right zero border (bottom taps)
    hpad_ref[:, lp:lp + P] = h.astype(jnp.float32)   # lane-aligned main store

    # --- 3x3 depthwise conv, pad=1, stride 1 over full image, dj-grouped mask ----
    # Padded flat index needed by tap (di, dj) at output p is
    #   (lp - W - 1) + di*W + dj + p ;
    # row-boundary taps land in the zero borders, column wrap-around across image
    # rows is cancelled by the per-dj column-validity mask (dj==1 needs no mask).
    base = lp - (W + 1)
    acc = None
    for dj in range(3):
        s = None
        for di in range(3):
            k = 3 * di + dj
            start = base + di * W + dj
            patch = hpad_ref[:, start:start + P]          # ref-sliced tap read
            term = w_dw_ref[:, k:k + 1] * patch
            s = term if s is None else s + term
        if dj == 0:
            s = mask_ref[0:1, :] * s
        elif dj == 2:
            s = mask_ref[1:2, :] * s
        acc = s if acc is None else acc + s

    y = jnp.clip(acc + b_dw_ref[...], 0.0, 6.0)           # (hidden, H*W)

    # --- 1x1 projection conv (+ folded BN) ---------------------------------------
    out = jnp.dot(w_pr_ref[...], y.astype(w_pr_ref.dtype),
                  preferred_element_type=jnp.float32)     # (Cout, H*W)

    if stride == 2:
        # Exact stride-2 spatial subsample, applied AFTER projection so the one-hot
        # matmul has M = Cout (not hidden). Column selection commutes with the
        # per-channel bias below.
        out = jnp.dot(out.astype(sub_ref.dtype), sub_ref[...],
                      preferred_element_type=jnp.float32)  # (Cout, Ho*Wo)

    out = out + b_pr_ref[...]
    if use_res:
        out = out + x
    out_ref[0] = out.astype(out_ref.dtype)        # lane-dense (Cout, Ho*Wo) store


# ------------------------------ kernel wrapper -------------------------------

def inverted_block_pallas(x_nchw, p, *, stride, expand_ratio, ch_in, ch_out,
                          mxu_dtype=jnp.float32):
    N, Cin, H, W = x_nchw.shape
    assert Cin == ch_in and stride in (1, 2)
    hidden = ch_in * expand_ratio
    use_res = (stride == 1 and ch_in == ch_out)
    expand = (expand_ratio != 1)
    P = H * W
    Ho = (H - 1) // stride + 1
    Wo = (W - 1) // stride + 1
    Po = Ho * Wo
    lp = ((W + 1 + 127) // 128) * 128             # lane-aligned left zero pad

    # Free reshape: NCHW row-major == (N, C, H*W). No host transposes / pads.
    x3 = x_nchw.reshape(N, Cin, P)

    # Column-validity masks for the dj=0 and dj=2 horizontal taps.
    col = jnp.arange(P, dtype=jnp.int32) % W
    colmask = jnp.stack([col >= 1, col <= W - 2]).astype(jnp.float32)   # (2, P)

    # BN scales folded into the conv weights (one-time host-side weight prep);
    # only the per-channel biases travel to the kernel.
    w_dw_flat = (jnp.transpose(p["w_dw"], (2, 0, 1)).reshape(hidden, 9)
                 * p["s_dw"][:, None]).astype(jnp.float32)
    w_proj_t = (p["w_proj"].T * p["s_proj"][:, None]).astype(mxu_dtype)

    args = [x3]
    in_specs = [pl.BlockSpec((1, Cin, P), lambda n: (n, 0, 0))]
    if expand:
        w_exp_t = (p["w_exp"].T * p["s_exp"][:, None]).astype(mxu_dtype)
        args += [w_exp_t, p["b_exp"].reshape(hidden, 1)]
        in_specs += [pl.BlockSpec((hidden, Cin), lambda n: (0, 0)),
                     pl.BlockSpec((hidden, 1), lambda n: (0, 0))]
    args += [w_dw_flat, p["b_dw"].reshape(hidden, 1), colmask]
    in_specs += [pl.BlockSpec((hidden, 9), lambda n: (0, 0)),
                 pl.BlockSpec((hidden, 1), lambda n: (0, 0)),
                 pl.BlockSpec((2, P), lambda n: (0, 0))]
    args += [w_proj_t, p["b_proj"].reshape(ch_out, 1)]
    in_specs += [pl.BlockSpec((ch_out, hidden), lambda n: (0, 0)),
                 pl.BlockSpec((ch_out, 1), lambda n: (0, 0))]
    if stride == 2:
        src = (2 * jnp.arange(Ho) * W)[:, None] + 2 * jnp.arange(Wo)[None, :]
        subsel = jnp.zeros((P, Po), jnp.float32).at[
            src.reshape(-1), jnp.arange(Po)].set(1.0).astype(mxu_dtype)
        args += [subsel]
        in_specs += [pl.BlockSpec((P, Po), lambda n: (0, 0))]

    kernel = functools.partial(
        _inverted_block_kernel, expand=expand, stride=stride,
        use_res=use_res, H=H, W=W, lp=lp)

    # Generation-aware VMEM budget: exact bytes (+25% headroom), capped at 3/4 of
    # the reported VMEM capacity (~48 MiB on v7x, up to ~96 MiB on v5e/v6e).
    f32b = 4
    mxub = jnp.dtype(mxu_dtype).itemsize
    w_elems_mxu = ((hidden * Cin if expand else 0) + ch_out * hidden
                   + (P * Po if stride == 2 else 0))
    small_f32 = hidden * 9 + 2 * P + 2 * hidden + ch_out
    est_bytes = (2 * Cin * P * f32b                 # input block (double-buffered)
                 + 2 * ch_out * Po * f32b           # output block (double-buffered)
                 + 2 * (w_elems_mxu * mxub + small_f32 * f32b)   # weights (x2 safe)
                 + hidden * (lp + P + W + 1) * f32b)             # padded-hidden scratch
    vmem_needed = int(est_bytes * 1.25) + (2 << 20)
    try:
        cap = int(pltpu.get_tpu_info().vmem_capacity_bytes)
    except Exception:
        cap = 64 << 20                              # conservative (v7x per-TC VMEM)
    vmem_limit = max(16 << 20, min(vmem_needed, (cap * 3) // 4))

    out3 = pl.pallas_call(
        kernel,
        out_shape=jax.ShapeDtypeStruct((N, ch_out, Po), x_nchw.dtype),
        grid=(N,),
        in_specs=in_specs,
        out_specs=pl.BlockSpec((1, ch_out, Po), lambda n: (n, 0, 0)),
        scratch_shapes=[pltpu.VMEM((hidden, lp + P + W + 1), jnp.float32)],
        compiler_params=pltpu.CompilerParams(
            dimension_semantics=("parallel",),
            vmem_limit_bytes=int(vmem_limit)),
    )(*args)
    return out3.reshape(N, ch_out, Ho, Wo)          # free reshape back to NCHW


# ------------------------------- parameters ----------------------------------

def make_params(key, ch_in, ch_out, expand_ratio):
    hidden = ch_in * expand_ratio
    ks = jax.random.split(key, 15)
    eps = 1e-5

    def folded_bn(kg, kb, km, kv, c):
        gamma = 1.0 + 0.1 * jax.random.normal(kg, (c,), jnp.float32)
        beta = 0.1 * jax.random.normal(kb, (c,), jnp.float32)
        mean = 0.1 * jax.random.normal(km, (c,), jnp.float32)
        var = jnp.abs(jax.random.normal(kv, (c,), jnp.float32)) + 0.5
        scale = gamma / jnp.sqrt(var + eps)
        bias = beta - mean * scale
        return scale, bias

    p = {}
    if expand_ratio != 1:
        p["w_exp"] = 0.2 * jax.random.normal(ks[0], (ch_in, hidden), jnp.float32)
        p["s_exp"], p["b_exp"] = folded_bn(ks[1], ks[2], ks[3], ks[4], hidden)
    p["w_dw"] = 0.2 * jax.random.normal(ks[5], (3, 3, hidden), jnp.float32)
    p["s_dw"], p["b_dw"] = folded_bn(ks[6], ks[7], ks[8], ks[9], hidden)
    p["w_proj"] = 0.2 * jax.random.normal(ks[10], (hidden, ch_out), jnp.float32)
    p["s_proj"], p["b_proj"] = folded_bn(ks[11], ks[12], ks[13], ks[14], ch_out)
    return p


# ----------------------------- pure-JAX reference ----------------------------

def inverted_block_ref(x_nchw, p, *, stride, expand_ratio, ch_in, ch_out):
    x = jnp.transpose(x_nchw, (0, 2, 3, 1))
    h = x
    if expand_ratio != 1:
        k = p["w_exp"].reshape(1, 1, ch_in, -1)
        h = lax.conv_general_dilated(h, k, (1, 1), "VALID",
                                     dimension_numbers=("NHWC", "HWIO", "NHWC"))
        h = jnp.clip(h * p["s_exp"] + p["b_exp"], 0.0, 6.0)
    hidden = h.shape[-1]
    kdw = p["w_dw"].reshape(3, 3, 1, hidden)
    h = lax.conv_general_dilated(h, kdw, (stride, stride), ((1, 1), (1, 1)),
                                 dimension_numbers=("NHWC", "HWIO", "NHWC"),
                                 feature_group_count=hidden)
    h = jnp.clip(h * p["s_dw"] + p["b_dw"], 0.0, 6.0)
    kpr = p["w_proj"].reshape(1, 1, hidden, ch_out)
    h = lax.conv_general_dilated(h, kpr, (1, 1), "VALID",
                                 dimension_numbers=("NHWC", "HWIO", "NHWC"))
    h = h * p["s_proj"] + p["b_proj"]
    if stride == 1 and ch_in == ch_out:
        h = h + x
    return jnp.transpose(h, (0, 3, 1, 2))


# ----------------------------------- main -------------------------------------

if __name__ == "__main__":
    # NOTE: these shapes are correctness-test sized; at Po=64 the MXU/per-step
    # overhead dominates, so benchmark only at real MobileNet shapes (or block
    # several images per grid step).
    N, H, W = 2, 16, 16
    configs = [
        dict(ch_in=4, ch_out=4, expand_ratio=2, stride=1),   # residual path
        dict(ch_in=4, ch_out=8, expand_ratio=2, stride=2),   # stride-2 downsample
        dict(ch_in=4, ch_out=6, expand_ratio=1, stride=1),   # no expand conv
    ]

    key = jax.random.PRNGKey(0)
    for cfg in configs:
        key, kx, kp = jax.random.split(key, 3)
        x = jax.random.normal(kx, (N, cfg["ch_in"], H, W), jnp.float32)
        params = make_params(kp, cfg["ch_in"], cfg["ch_out"], cfg["expand_ratio"])

        ref = inverted_block_ref(x, params, **cfg)

        # Strict f32 path (matmul operands kept in f32).
        out = jax.block_until_ready(inverted_block_pallas(x, params, **cfg))
        assert out.shape == ref.shape, f"shape mismatch for {cfg}"
        assert jnp.allclose(out, ref, atol=2e-4, rtol=2e-4), f"f32 mismatch for {cfg}"

        # Production bf16-MXU-operand path (f32 accumulation): looser tolerance
        # by design, as recommended in the perf review.
        out_bf = jax.block_until_ready(
            inverted_block_pallas(x, params, mxu_dtype=jnp.bfloat16, **cfg))
        assert out_bf.shape == ref.shape, f"bf16 shape mismatch for {cfg}"
        assert jnp.allclose(out_bf, ref, atol=2e-1, rtol=2e-1), f"bf16 mismatch for {cfg}"

    print("KERNEL_OK")
</pallas_src>

<mosaic_0001>
module attributes {stable_mosaic.version = 11 : i64} {
  func.func @_inverted_block_kernel(%arg0: i32, %arg1: memref<1x4x256xf32, #tpu.memory_space<vmem>>, %arg2: memref<8x4xf32, #tpu.memory_space<vmem>>, %arg3: memref<8x1xf32, #tpu.memory_space<vmem>>, %arg4: memref<8x9xf32, #tpu.memory_space<vmem>>, %arg5: memref<8x1xf32, #tpu.memory_space<vmem>>, %arg6: memref<2x256xf32, #tpu.memory_space<vmem>>, %arg7: memref<4x8xf32, #tpu.memory_space<vmem>>, %arg8: memref<4x1xf32, #tpu.memory_space<vmem>>, %arg9: memref<1x4x256xf32, #tpu.memory_space<vmem>>, %arg10: memref<8x401xf32, #tpu.memory_space<vmem>>) attributes {dimension_semantics = [#tpu.dimension_semantics<parallel>], iteration_bounds = array<i64: 2>, scalar_prefetch = 0 : i64, scratch_operands = 1 : i64, tpu.core_type = #tpu.core_type<tc>, window_params = [{transform_indices = @transform_0, window_bounds = array<i64: 1, 4, 256>}, {pipeline_mode = #tpu.pipeline_mode<synchronous>, transform_indices = @transform_1, window_bounds = array<i64: 8, 4>}, {pipeline_mode = #tpu.pipeline_mode<synchronous>, transform_indices = @transform_2, window_bounds = array<i64: 8, 1>}, {pipeline_mode = #tpu.pipeline_mode<synchronous>, transform_indices = @transform_3, window_bounds = array<i64: 8, 9>}, {pipeline_mode = #tpu.pipeline_mode<synchronous>, transform_indices = @transform_4, window_bounds = array<i64: 8, 1>}, {pipeline_mode = #tpu.pipeline_mode<synchronous>, transform_indices = @transform_5, window_bounds = array<i64: 2, 256>}, {pipeline_mode = #tpu.pipeline_mode<synchronous>, transform_indices = @transform_6, window_bounds = array<i64: 4, 8>}, {pipeline_mode = #tpu.pipeline_mode<synchronous>, transform_indices = @transform_7, window_bounds = array<i64: 4, 1>}, {transform_indices = @transform_8, window_bounds = array<i64: 1, 4, 256>}]} {
    %c0 = arith.constant 0 : index
    %c0_0 = arith.constant 0 : index
    %c0_1 = arith.constant 0 : index
    %0 = vector.load %arg1[%c0, %c0_0, %c0_1] : memref<1x4x256xf32, #tpu.memory_space<vmem>>, vector<1x4x256xf32>
    %1 = vector.shape_cast %0 : vector<1x4x256xf32> to vector<4x256xf32>
    %c0_2 = arith.constant 0 : index
    %c0_3 = arith.constant 0 : index
    %2 = vector.load %arg2[%c0_2, %c0_3] : memref<8x4xf32, #tpu.memory_space<vmem>>, vector<8x4xf32>
    %cst = arith.constant dense<0.000000e+00> : vector<8x256xf32>
    %3 = tpu.matmul %2, %1, %cst {dimension_numbers = #tpu.dot_dimension_numbers<[1], [0], [0], [1], [0, 0, 1, 1], [], []>} : vector<8x4xf32>, vector<4x256xf32>, vector<8x256xf32> -> vector<8x256xf32>
    %c0_4 = arith.constant 0 : index
    %c0_5 = arith.constant 0 : index
    %4 = vector.load %arg3[%c0_4, %c0_5] : memref<8x1xf32, #tpu.memory_space<vmem>>, vector<8x1xf32>
    %5 = vector.broadcast %4 : vector<8x1xf32> to vector<8x256xf32>
    %6 = arith.addf %3, %5 : vector<8x256xf32>
    %cst_6 = arith.constant 0.000000e+00 : f32
    %cst_7 = arith.constant 6.000000e+00 : f32
    %7 = vector.broadcast %cst_6 : f32 to vector<8x256xf32>
    %8 = arith.maximumf %7, %6 : vector<8x256xf32>
    %9 = vector.broadcast %cst_7 : f32 to vector<8x256xf32>
    %10 = arith.minimumf %9, %8 : vector<8x256xf32>
    %cst_8 = arith.constant 0.000000e+00 : f32
    %11 = vector.broadcast %cst_8 : f32 to vector<8x17xf32>
    %c0_9 = arith.constant 0 : index
    %c111 = arith.constant 111 : index
    %12 = vector.load %arg10[%c0_9, %c111] : memref<8x401xf32, #tpu.memory_space<vmem>>, vector<8x17xf32>
    tpu.vector_store %arg10[%c0_9, %c111], %11 {strides = array<i32>} : memref<8x401xf32, #tpu.memory_space<vmem>>, vector<8x17xf32>,
    %c0_10 = arith.constant 0 : index
    %c384 = arith.constant 384 : index
    %13 = vector.load %arg10[%c0_10, %c384] : memref<8x401xf32, #tpu.memory_space<vmem>>, vector<8x17xf32>
    tpu.vector_store %arg10[%c0_10, %c384], %11 {strides = array<i32>} : memref<8x401xf32, #tpu.memory_space<vmem>>, vector<8x17xf32>,
    %c0_11 = arith.constant 0 : index
    %c128 = arith.constant 128 : index
    %14 = vector.load %arg10[%c0_11, %c128] : memref<8x401xf32, #tpu.memory_space<vmem>>, vector<8x256xf32>
    tpu.vector_store %arg10[%c0_11, %c128], %10 {strides = array<i32>} : memref<8x401xf32, #tpu.memory_space<vmem>>, vector<8x256xf32>,
    %c0_12 = arith.constant 0 : index
    %c111_13 = arith.constant 111 : index
    %15 = vector.load %arg10[%c0_12, %c111_13] : memref<8x401xf32, #tpu.memory_space<vmem>>, vector<8x256xf32>
    %c0_14 = arith.constant 0 : index
    %c0_15 = arith.constant 0 : index
    %16 = vector.load %arg4[%c0_14, %c0_15] : memref<8x9xf32, #tpu.memory_space<vmem>>, vector<8x1xf32>
    %17 = vector.broadcast %16 : vector<8x1xf32> to vector<8x256xf32>
    %18 = arith.mulf %17, %15 : vector<8x256xf32>
    %c0_16 = arith.constant 0 : index
    %c127 = arith.constant 127 : index
    %19 = vector.load %arg10[%c0_16, %c127] : memref<8x401xf32, #tpu.memory_space<vmem>>, vector<8x256xf32>
    %c0_17 = arith.constant 0 : index
    %c3 = arith.constant 3 : index
    %20 = vector.load %arg4[%c0_17, %c3] : memref<8x9xf32, #tpu.memory_space<vmem>>, vector<8x1xf32>
    %21 = vector.broadcast %20 : vector<8x1xf32> to vector<8x256xf32>
    %22 = arith.mulf %21, %19 : vector<8x256xf32>
    %23 = arith.addf %18, %22 : vector<8x256xf32>
    %c0_18 = arith.constant 0 : index
    %c143 = arith.constant 143 : index
    %24 = vector.load %arg10[%c0_18, %c143] : memref<8x401xf32, #tpu.memory_space<vmem>>, vector<8x256xf32>
    %c0_19 = arith.constant 0 : index
    %c6 = arith.constant 6 : index
    %25 = vector.load %arg4[%c0_19, %c6] : memref<8x9xf32, #tpu.memory_space<vmem>>, vector<8x1xf32>
    %26 = vector.broadcast %25 : vector<8x1xf32> to vector<8x256xf32>
    %27 = arith.mulf %26, %24 : vector<8x256xf32>
    %28 = arith.addf %23, %27 : vector<8x256xf32>
    %c0_20 = arith.constant 0 : index
    %c0_21 = arith.constant 0 : index
    %29 = vector.load %arg6[%c0_20, %c0_21] : memref<2x256xf32, #tpu.memory_space<vmem>>, vector<1x256xf32>
    %30 = vector.broadcast %29 : vector<1x256xf32> to vector<8x256xf32>
    %31 = arith.mulf %30, %28 : vector<8x256xf32>
    %c0_22 = arith.constant 0 : index
    %c112 = arith.constant 112 : index
    %32 = vector.load %arg10[%c0_22, %c112] : memref<8x401xf32, #tpu.memory_space<vmem>>, vector<8x256xf32>
    %c0_23 = arith.constant 0 : index
    %c1 = arith.constant 1 : index
    %33 = vector.load %arg4[%c0_23, %c1] : memref<8x9xf32, #tpu.memory_space<vmem>>, vector<8x1xf32>
    %34 = vector.broadcast %33 : vector<8x1xf32> to vector<8x256xf32>
    %35 = arith.mulf %34, %32 : vector<8x256xf32>
    %c0_24 = arith.constant 0 : index
    %c128_25 = arith.constant 128 : index
    %36 = vector.load %arg10[%c0_24, %c128_25] : memref<8x401xf32, #tpu.memory_space<vmem>>, vector<8x256xf32>
    %c0_26 = arith.constant 0 : index
    %c4 = arith.constant 4 : index
    %37 = vector.load %arg4[%c0_26, %c4] : memref<8x9xf32, #tpu.memory_space<vmem>>, vector<8x1xf32>
    %38 = vector.broadcast %37 : vector<8x1xf32> to vector<8x256xf32>
    %39 = arith.mulf %38, %36 : vector<8x256xf32>
    %40 = arith.addf %35, %39 : vector<8x256xf32>
    %c0_27 = arith.constant 0 : index
    %c144 = arith.constant 144 : index
    %41 = vector.load %arg10[%c0_27, %c144] : memref<8x401xf32, #tpu.memory_space<vmem>>, vector<8x256xf32>
    %c0_28 = arith.constant 0 : index
    %c7 = arith.constant 7 : index
    %42 = vector.load %arg4[%c0_28, %c7] : memref<8x9xf32, #tpu.memory_space<vmem>>, vector<8x1xf32>
    %43 = vector.broadcast %42 : vector<8x1xf32> to vector<8x256xf32>
    %44 = arith.mulf %43, %41 : vector<8x256xf32>
    %45 = arith.addf %40, %44 : vector<8x256xf32>
    %46 = arith.addf %31, %45 : vector<8x256xf32>
    %c0_29 = arith.constant 0 : index
    %c113 = arith.constant 113 : index
    %47 = vector.load %arg10[%c0_29, %c113] : memref<8x401xf32, #tpu.memory_space<vmem>>, vector<8x256xf32>
    %c0_30 = arith.constant 0 : index
    %c2 = arith.constant 2 : index
    %48 = vector.load %arg4[%c0_30, %c2] : memref<8x9xf32, #tpu.memory_space<vmem>>, vector<8x1xf32>
    %49 = vector.broadcast %48 : vector<8x1xf32> to vector<8x256xf32>
    %50 = arith.mulf %49, %47 : vector<8x256xf32>
    %c0_31 = arith.constant 0 : index
    %c129 = arith.constant 129 : index
    %51 = vector.load %arg10[%c0_31, %c129] : memref<8x401xf32, #tpu.memory_space<vmem>>, vector<8x256xf32>
    %c0_32 = arith.constant 0 : index
    %c5 = arith.constant 5 : index
    %52 = vector.load %arg4[%c0_32, %c5] : memref<8x9xf32, #tpu.memory_space<vmem>>, vector<8x1xf32>
    %53 = vector.broadcast %52 : vector<8x1xf32> to vector<8x256xf32>
    %54 = arith.mulf %53, %51 : vector<8x256xf32>
    %55 = arith.addf %50, %54 : vector<8x256xf32>
    %c0_33 = arith.constant 0 : index
    %c145 = arith.constant 145 : index
    %56 = vector.load %arg10[%c0_33, %c145] : memref<8x401xf32, #tpu.memory_space<vmem>>, vector<8x256xf32>
    %c0_34 = arith.constant 0 : index
    %c8 = arith.constant 8 : index
    %57 = vector.load %arg4[%c0_34, %c8] : memref<8x9xf32, #tpu.memory_space<vmem>>, vector<8x1xf32>
    %58 = vector.broadcast %57 : vector<8x1xf32> to vector<8x256xf32>
    %59 = arith.mulf %58, %56 : vector<8x256xf32>
    %60 = arith.addf %55, %59 : vector<8x256xf32>
    %c1_35 = arith.constant 1 : index
    %c0_36 = arith.constant 0 : index
    %61 = vector.load %arg6[%c1_35, %c0_36] : memref<2x256xf32, #tpu.memory_space<vmem>>, vector<1x256xf32>
    %62 = vector.broadcast %61 : vector<1x256xf32> to vector<8x256xf32>
    %63 = arith.mulf %62, %60 : vector<8x256xf32>
    %64 = arith.addf %46, %63 : vector<8x256xf32>
    %c0_37 = arith.constant 0 : index
    %c0_38 = arith.constant 0 : index
    %65 = vector.load %arg5[%c0_37, %c0_38] : memref<8x1xf32, #tpu.memory_space<vmem>>, vector<8x1xf32>
    %66 = vector.broadcast %65 : vector<8x1xf32> to vector<8x256xf32>
    %67 = arith.addf %64, %66 : vector<8x256xf32>
    %cst_39 = arith.constant 0.000000e+00 : f32
    %cst_40 = arith.constant 6.000000e+00 : f32
    %68 = vector.broadcast %cst_39 : f32 to vector<8x256xf32>
    %69 = arith.maximumf %68, %67 : vector<8x256xf32>
    %70 = vector.broadcast %cst_40 : f32 to vector<8x256xf32>
    %71 = arith.minimumf %70, %69 : vector<8x256xf32>
    %c0_41 = arith.constant 0 : index
    %c0_42 = arith.constant 0 : index
    %72 = vector.load %arg7[%c0_41, %c0_42] : memref<4x8xf32, #tpu.memory_space<vmem>>, vector<4x8xf32>
    %cst_43 = arith.constant dense<0.000000e+00> : vector<4x256xf32>
    %73 = tpu.matmul %72, %71, %cst_43 {dimension_numbers = #tpu.dot_dimension_numbers<[1], [0], [0], [1], [0, 0, 1, 1], [], []>} : vector<4x8xf32>, vector<8x256xf32>, vector<4x256xf32> -> vector<4x256xf32>
    %c0_44 = arith.constant 0 : index
    %c0_45 = arith.constant 0 : index
    %74 = vector.load %arg8[%c0_44, %c0_45] : memref<4x1xf32, #tpu.memory_space<vmem>>, vector<4x1xf32>
    %75 = vector.broadcast %74 : vector<4x1xf32> to vector<4x256xf32>
    %76 = arith.addf %73, %75 : vector<4x256xf32>
    %77 = arith.addf %76, %1 : vector<4x256xf32>
    %c0_46 = arith.constant 0 : index
    %c0_47 = arith.constant 0 : index
    %c0_48 = arith.constant 0 : index
    %78 = vector.load %arg9[%c0_46, %c0_47, %c0_48] : memref<1x4x256xf32, #tpu.memory_space<vmem>>, vector<1x4x256xf32>
    %79 = vector.shape_cast %78 : vector<1x4x256xf32> to vector<4x256xf32>
    %80 = vector.shape_cast %77 : vector<4x256xf32> to vector<1x4x256xf32>
    tpu.vector_store %arg9[%c0_46, %c0_47, %c0_48], %80 {strides = array<i32>} : memref<1x4x256xf32, #tpu.memory_space<vmem>>, vector<1x4x256xf32>,
    return
  }
  func.func @transform_0(%arg0: i32) -> (i32, i32, i32) {
    %c0_i32 = arith.constant 0 : i32
    %c0_i32_0 = arith.constant 0 : i32
    %c0_i32_1 = arith.constant 0 : i32
    return %arg0, %c0_i32, %c0_i32_0 : i32, i32, i32
  }
  func.func @transform_1(%arg0: i32) -> (i32, i32) {
    %c0_i32 = arith.constant 0 : i32
    %c0_i32_0 = arith.constant 0 : i32
    %c0_i32_1 = arith.constant 0 : i32
    return %c0_i32, %c0_i32_0 : i32, i32
  }
  func.func @transform_2(%arg0: i32) -> (i32, i32) {
    %c0_i32 = arith.constant 0 : i32
    %c0_i32_0 = arith.constant 0 : i32
    %c0_i32_1 = arith.constant 0 : i32
    return %c0_i32, %c0_i32_0 : i32, i32
  }
  func.func @transform_3(%arg0: i32) -> (i32, i32) {
    %c0_i32 = arith.constant 0 : i32
    %c0_i32_0 = arith.constant 0 : i32
    %c0_i32_1 = arith.constant 0 : i32
    return %c0_i32, %c0_i32_0 : i32, i32
  }
  func.func @transform_4(%arg0: i32) -> (i32, i32) {
    %c0_i32 = arith.constant 0 : i32
    %c0_i32_0 = arith.constant 0 : i32
    %c0_i32_1 = arith.constant 0 : i32
    return %c0_i32, %c0_i32_0 : i32, i32
  }
  func.func @transform_5(%arg0: i32) -> (i32, i32) {
    %c0_i32 = arith.constant 0 : i32
    %c0_i32_0 = arith.constant 0 : i32
    %c0_i32_1 = arith.constant 0 : i32
    return %c0_i32, %c0_i32_0 : i32, i32
  }
  func.func @transform_6(%arg0: i32) -> (i32, i32) {
    %c0_i32 = arith.constant 0 : i32
    %c0_i32_0 = arith.constant 0 : i32
    %c0_i32_1 = arith.constant 0 : i32
    return %c0_i32, %c0_i32_0 : i32, i32
  }
  func.func @transform_7(%arg0: i32) -> (i32, i32) {
    %c0_i32 = arith.constant 0 : i32
    %c0_i32_0 = arith.constant 0 : i32
    %c0_i32_1 = arith.constant 0 : i32
    return %c0_i32, %c0_i32_0 : i32, i32
  }
  func.func @transform_8(%arg0: i32) -> (i32, i32, i32) {
    %c0_i32 = arith.constant 0 : i32
    %c0_i32_0 = arith.constant 0 : i32
    %c0_i32_1 = arith.constant 0 : i32
    return %arg0, %c0_i32, %c0_i32_0 : i32, i32, i32
  }
}

</mosaic_0001>

<llo_original>
// kernel: tpu_custom_call.1
$region0: #{tpu_custom_call.1}
  #allocation0 [shape = 'u32[]', space=smem, size = 0x4, offset = 0x4, fixed_abs, tag = 'smem constant byte address 0x4 - core index']
  #allocation1 [shape = 'u32[72,128]{1,0:T(1,128)}', space=vmem, size = 0x9000, scoped, tag = 'internal scratch']
  #allocation2 [shape = 'f32[8,401]{1,0:T(8,128)}', space=vmem, size = 0x4000, scoped, tag = 'scratch operand']
  %s0 = inlined_call_operand.vmem [shape: f32[2,4,256], index: 0, kind: input, shape index: {}]
  %s1 = inlined_call_operand.vmem [shape: f32[8,4], index: 1, kind: input, shape index: {}]
  %s2 = inlined_call_operand.vmem [shape: f32[8,1], index: 2, kind: input, shape index: {}]
  %s3 = inlined_call_operand.vmem [shape: f32[8,9], index: 3, kind: input, shape index: {}]
  %s4 = inlined_call_operand.vmem [shape: f32[8,1], index: 4, kind: input, shape index: {}]
  %s5 = inlined_call_operand.vmem [shape: f32[2,256], index: 5, kind: input, shape index: {}]
  %s6 = inlined_call_operand.vmem [shape: f32[4,8], index: 6, kind: input, shape index: {}]
  %s7 = inlined_call_operand.vmem [shape: f32[4,1], index: 7, kind: input, shape index: {}]
  %s8 = inlined_call_operand.hbm [shape: f32[2,4,256], index: 8, kind: output, shape index: {}]
  %s9 = sld [smem:[#allocation0]]
  $region65: #{tpu_custom_call.1} parent=0
    _
  %s11 = ssub.s32 1, %s9
  %s12 = scalar_select 0, %s11, %s9
  $region1: #{tpu_custom_call.1} parent=0
    #allocation3 [shape = 'u8[8192]{0}', space=vmem, size = 0x2000, scoped, tag = 'output window, operand 0']
    #allocation4 [shape = 's32[2]{0}', space=sflag, size = 0x8, scoped, tag = 'scoped memory for tpu_custom_call.1']
    %13 = vsyncpa [#allocation4], 0
    %s14 = scalar_lea.sflag [#allocation4], 1
    %15 = vsyncpa %s14, 0
    loop: start=0, step=1, limit=4
    $region2: #{tpu_custom_call.1} parent=1 // loop_pre_header
      _
    $region3: #{tpu_custom_call.1} parent=1 // loop_header
      %s17 = sphi 0, %s21
      %p18 = scmp.ge.s32.totalorder %s17, 4
      %s27 = sphi 0, %s29
      %s30 = sphi 0, %s27
      %s31 = sphi 0, %s30
      %s47 = sphi 0, %s31
      %s51 = sphi 0, %s51
      %s53 = sphi 0, %s51
      %s54 = sphi 0, %s53
      %s68 = sphi 0, %s54
      %s72 = sphi 0, %s72
      %s74 = sphi 0, %s72
      %s75 = sphi 0, %s74
      %s89 = sphi 0, %s75
      %s93 = sphi 0, %s93
      %s95 = sphi 0, %s93
      %s96 = sphi 0, %s95
      %s110 = sphi 0, %s96
      %s114 = sphi 0, %s114
      %s116 = sphi 0, %s114
      %s117 = sphi 0, %s116
      %s131 = sphi 0, %s117
      %s135 = sphi 0, %s135
      %s137 = sphi 0, %s135
      %s138 = sphi 0, %s137
      %s152 = sphi 0, %s138
      %s156 = sphi 0, %s156
      %s158 = sphi 0, %s156
      %s159 = sphi 0, %s158
      %s173 = sphi 0, %s159
      %s177 = sphi 0, %s177
      %s179 = sphi 0, %s177
      %s180 = sphi 0, %s179
      %s194 = sphi 0, %s180
      %s200 = sphi 0, %s202
      %s203 = sphi 0, %s200
      %s204 = sphi 0, %s203
      %s220 = sphi 0, %s204
    $region4: #{tpu_custom_call.1} parent=1 // loop_header_branch
      %20 = sbr.rel (%p18) target = $region8
    $region5: #{tpu_custom_call.1} parent=1 // loop_body
      %s22 = ssub.s32 %s17, 1
      %s23 = ssub.s32 %s17, 2
      %s24 = sadd.s32 %s17, 1
      %s25 = ssub.s32 %s17, %s24
      %p26 = scmp.eq.s32.totalorder %s25, 0
      %s28 = sadd.s32 %s27, 1
      %s29 = scalar_select %p26, %s27, %s28
      %p32 = pneg %p26
      %p33 = scmp.eq.s32.totalorder %s17, 1
      %p34 = por %p32, %p33
      %p35 = scmp.ne.s32.totalorder %s27, %s30
      %p36 = scmp.eq.s32.totalorder %s17, 0
      %p37 = por %p35, %p36
      %p38 = scmp.ne.s32.totalorder %s27, %s30
      %p39 = scmp.eq.s32.totalorder %s22, 1
      %p40 = por %p38, %p39
      %p41 = scmp.ne.s32.totalorder %s30, %s31
      %p42 = scmp.eq.s32.totalorder %s22, 0
      %p43 = por %p41, %p42
      %p44 = scmp.ne.s32.totalorder %s30, %s31
      %p45 = scmp.eq.s32.totalorder %s23, 1
      %p46 = por %p44, %p45
      %p48 = scmp.ne.s32.totalorder %s31, %s47
      %p49 = scmp.eq.s32.totalorder %s23, 0
      %p50 = por %p48, %p49
      %s52 = sadd.s32 %s51, 1
      %p55 = scmp.eq.s32.totalorder %s17, 1
      %p56 = scmp.ne.s32.totalorder %s51, %s53
      %p57 = scmp.eq.s32.totalorder %s17, 0
      %p58 = por %p56, %p57
      %p59 = scmp.ne.s32.totalorder %s51, %s53
      %p60 = scmp.eq.s32.totalorder %s22, 1
      %p61 = por %p59, %p60
      %p62 = scmp.ne.s32.totalorder %s53, %s54
      %p63 = scmp.eq.s32.totalorder %s22, 0
      %p64 = por %p62, %p63
      %p65 = scmp.ne.s32.totalorder %s53, %s54
      %p66 = scmp.eq.s32.totalorder %s23, 1
      %p67 = por %p65, %p66
      %p69 = scmp.ne.s32.totalorder %s54, %s68
      %p70 = scmp.eq.s32.totalorder %s23, 0
      %p71 = por %p69, %p70
      %s73 = sadd.s32 %s72, 1
      %p76 = scmp.eq.s32.totalorder %s17, 1
      %p77 = scmp.ne.s32.totalorder %s72, %s74
      %p78 = scmp.eq.s32.totalorder %s17, 0
      %p79 = por %p77, %p78
      %p80 = scmp.ne.s32.totalorder %s72, %s74
      %p81 = scmp.eq.s32.totalorder %s22, 1
      %p82 = por %p80, %p81
      %p83 = scmp.ne.s32.totalorder %s74, %s75
      %p84 = scmp.eq.s32.totalorder %s22, 0
      %p85 = por %p83, %p84
      %p86 = scmp.ne.s32.totalorder %s74, %s75
      %p87 = scmp.eq.s32.totalorder %s23, 1
      %p88 = por %p86, %p87
      %p90 = scmp.ne.s32.totalorder %s75, %s89
      %p91 = scmp.eq.s32.totalorder %s23, 0
      %p92 = por %p90, %p91
      %s94 = sadd.s32 %s93, 1
      %p97 = scmp.eq.s32.totalorder %s17, 1
      %p98 = scmp.ne.s32.totalorder %s93, %s95
      %p99 = scmp.eq.s32.totalorder %s17, 0
      %p100 = por %p98, %p99
      %p101 = scmp.ne.s32.totalorder %s93, %s95
      %p102 = scmp.eq.s32.totalorder %s22, 1
      %p103 = por %p101, %p102
      %p104 = scmp.ne.s32.totalorder %s95, %s96
      %p105 = scmp.eq.s32.totalorder %s22, 0
      %p106 = por %p104, %p105
      %p107 = scmp.ne.s32.totalorder %s95, %s96
      %p108 = scmp.eq.s32.totalorder %s23, 1
      %p109 = por %p107, %p108
      %p111 = scmp.ne.s32.totalorder %s96, %s110
      %p112 = scmp.eq.s32.totalorder %s23, 0
      %p113 = por %p111, %p112
      %s115 = sadd.s32 %s114, 1
      %p118 = scmp.eq.s32.totalorder %s17, 1
      %p119 = scmp.ne.s32.totalorder %s114, %s116
      %p120 = scmp.eq.s32.totalorder %s17, 0
      %p121 = por %p119, %p120
      %p122 = scmp.ne.s32.totalorder %s114, %s116
      %p123 = scmp.eq.s32.totalorder %s22, 1
      %p124 = por %p122, %p123
      %p125 = scmp.ne.s32.totalorder %s116, %s117
      %p126 = scmp.eq.s32.totalorder %s22, 0
      %p127 = por %p125, %p126
      %p128 = scmp.ne.s32.totalorder %s116, %s117
      %p129 = scmp.eq.s32.totalorder %s23, 1
      %p130 = por %p128, %p129
      %p132 = scmp.ne.s32.totalorder %s117, %s131
      %p133 = scmp.eq.s32.totalorder %s23, 0
      %p134 = por %p132, %p133
      %s136 = sadd.s32 %s135, 1
      %p139 = scmp.eq.s32.totalorder %s17, 1
      %p140 = scmp.ne.s32.totalorder %s135, %s137
      %p141 = scmp.eq.s32.totalorder %s17, 0
      %p142 = por %p140, %p141
      %p143 = scmp.ne.s32.totalorder %s135, %s137
      %p144 = scmp.eq.s32.totalorder %s22, 1
      %p145 = por %p143, %p144
      %p146 = scmp.ne.s32.totalorder %s137, %s138
      %p147 = scmp.eq.s32.totalorder %s22, 0
      %p148 = por %p146, %p147
      %p149 = scmp.ne.s32.totalorder %s137, %s138
      %p150 = scmp.eq.s32.totalorder %s23, 1
      %p151 = por %p149, %p150
      %p153 = scmp.ne.s32.totalorder %s138, %s152
      %p154 = scmp.eq.s32.totalorder %s23, 0
      %p155 = por %p153, %p154
      %s157 = sadd.s32 %s156, 1
      %p160 = scmp.eq.s32.totalorder %s17, 1
      %p161 = scmp.ne.s32.totalorder %s156, %s158
      %p162 = scmp.eq.s32.totalorder %s17, 0
      %p163 = por %p161, %p162
      %p164 = scmp.ne.s32.totalorder %s156, %s158
      %p165 = scmp.eq.s32.totalorder %s22, 1
      %p166 = por %p164, %p165
      %p167 = scmp.ne.s32.totalorder %s158, %s159
      %p168 = scmp.eq.s32.totalorder %s22, 0
      %p169 = por %p167, %p168
      %p170 = scmp.ne.s32.totalorder %s158, %s159
      %p171 = scmp.eq.s32.totalorder %s23, 1
      %p172 = por %p170, %p171
      %p174 = scmp.ne.s32.totalorder %s159, %s173
      %p175 = scmp.eq.s32.totalorder %s23, 0
      %p176 = por %p174, %p175
      %s178 = sadd.s32 %s177, 1
      %p181 = scmp.eq.s32.totalorder %s17, 1
      %p182 = scmp.ne.s32.totalorder %s177, %s179
      %p183 = scmp.eq.s32.totalorder %s17, 0
      %p184 = por %p182, %p183
      %p185 = scmp.ne.s32.totalorder %s177, %s179
      %p186 = scmp.eq.s32.totalorder %s22, 1
      %p187 = por %p185, %p186
      %p188 = scmp.ne.s32.totalorder %s179, %s180
      %p189 = scmp.eq.s32.totalorder %s22, 0
      %p190 = por %p188, %p189
      %p191 = scmp.ne.s32.totalorder %s179, %s180
      %p192 = scmp.eq.s32.totalorder %s23, 1
      %p193 = por %p191, %p192
      %p195 = scmp.ne.s32.totalorder %s180, %s194
      %p196 = scmp.eq.s32.totalorder %s23, 0
      %p197 = por %p195, %p196
      %s198 = ssub.s32 %s17, %s24
      %p199 = scmp.eq.s32.totalorder %s198, 0
      %s201 = sadd.s32 %s200, 1
      %s202 = scalar_select %p199, %s200, %s201
      %p205 = pneg %p199
      %p206 = scmp.eq.s32.totalorder %s17, 1
      %p207 = por %p205, %p206
      %p208 = scmp.ne.s32.totalorder %s200, %s203
      %p209 = scmp.eq.s32.totalorder %s17, 0
      %p210 = por %p208, %p209
      %p211 = scmp.ne.s32.totalorder %s200, %s203
      %p212 = scmp.eq.s32.totalorder %s22, 1
      %p213 = por %p211, %p212
      %p214 = scmp.ne.s32.totalorder %s203, %s204
      %p215 = scmp.eq.s32.totalorder %s22, 0
      %p216 = por %p214, %p215
      %p217 = scmp.ne.s32.totalorder %s203, %s204
      %p218 = scmp.eq.s32.totalorder %s23, 1
      %p219 = por %p217, %p218
      %p221 = scmp.ne.s32.totalorder %s204, %s220
      %p222 = scmp.eq.s32.totalorder %s23, 0
      %p223 = por %p221, %p222
      %p224 = scmp.le.s32.totalorder 1, %s17
      %p225 = scmp.lt.s32.totalorder %s17, 3
      %p226 = pnand %p224, %p225
      %p227 = pneg %p226
      // Predicated region
      $region9: #{tpu_custom_call.1} parent=5 // pred_check
        _
      $region10: #{tpu_custom_call.1} parent=5 // pred_check_branch
        %229 = sbr.rel (%p226) target = $region12
      $region11: #{tpu_custom_call.1} parent=5 // pred_region
        %s230 = ssub.s32 %s17, 1
        // Predicated region
        $region13: #{tpu_custom_call.1} parent=11 // pred_check
          %p231 = pneg %p64
        $region14: #{tpu_custom_call.1} parent=11 // pred_check_branch
          %233 = sbr.rel (%p231) target = $region16
        $region15: #{tpu_custom_call.1} parent=11 // pred_region
          _
        $region16: #{tpu_custom_call.1} parent=11 // pred_fallthru
          _
        // Predicated region
        $region17: #{tpu_custom_call.1} parent=11 // pred_check
          %p234 = pneg %p85
        $region18: #{tpu_custom_call.1} parent=11 // pred_check_branch
          %236 = sbr.rel (%p234) target = $region20
        $region19: #{tpu_custom_call.1} parent=11 // pred_region
          _
        $region20: #{tpu_custom_call.1} parent=11 // pred_fallthru
          _
        // Predicated region
        $region21: #{tpu_custom_call.1} parent=11 // pred_check
          %p237 = pneg %p106
        $region22: #{tpu_custom_call.1} parent=11 // pred_check_branch
          %239 = sbr.rel (%p237) target = $region24
        $region23: #{tpu_custom_call.1} parent=11 // pred_region
          _
        $region24: #{tpu_custom_call.1} parent=11 // pred_fallthru
          _
        // Predicated region
        $region25: #{tpu_custom_call.1} parent=11 // pred_check
          %p240 = pneg %p127
        $region26: #{tpu_custom_call.1} parent=11 // pred_check_branch
          %242 = sbr.rel (%p240) target = $region28
        $region27: #{tpu_custom_call.1} parent=11 // pred_region
          _
        $region28: #{tpu_custom_call.1} parent=11 // pred_fallthru
          _
        // Predicated region
        $region29: #{tpu_custom_call.1} parent=11 // pred_check
          %p243 = pneg %p148
        $region30: #{tpu_custom_call.1} parent=11 // pred_check_branch
          %245 = sbr.rel (%p243) target = $region32
        $region31: #{tpu_custom_call.1} parent=11 // pred_region
          _
        $region32: #{tpu_custom_call.1} parent=11 // pred_fallthru
          _
        // Predicated region
        $region33: #{tpu_custom_call.1} parent=11 // pred_check
          %p246 = pneg %p169
        $region34: #{tpu_custom_call.1} parent=11 // pred_check_branch
          %248 = sbr.rel (%p246) target = $region36
        $region35: #{tpu_custom_call.1} parent=11 // pred_region
          _
        $region36: #{tpu_custom_call.1} parent=11 // pred_fallthru
          _
        // Predicated region
        $region37: #{tpu_custom_call.1} parent=11 // pred_check
          %p249 = pneg %p190
        $region38: #{tpu_custom_call.1} parent=11 // pred_check_branch
          %251 = sbr.rel (%p249) target = $region40
        $region39: #{tpu_custom_call.1} parent=11 // pred_region
          _
        $region40: #{tpu_custom_call.1} parent=11 // pred_fallthru
          _
      $region12: #{tpu_custom_call.1} parent=5 // pred_fallthru
        _
      %p252 = scmp.lt.s32.totalorder %s17, 2
      // Predicated region
      $region41: #{tpu_custom_call.1} parent=5 // pred_check
        %p253 = pneg %p252
      $region42: #{tpu_custom_call.1} parent=5 // pred_check_branch
        %255 = sbr.rel (%p253) target = $region44
      $region43: #{tpu_custom_call.1} parent=5 // pred_region
        // Predicated region
        $region45: #{tpu_custom_call.1} parent=43 // pred_check
          %p256 = pneg %p37
        $region46: #{tpu_custom_call.1} parent=43 // pred_check_branch
          %258 = sbr.rel (%p256) target = $region48
        $region47: #{tpu_custom_call.1} parent=43 // pred_region
          %p259 = scmp.lt.s32.totalorder %s17, 1
          %s260 = scalar_select %p259, %s17, 1
          %s261 = smul.addr %s260, 2
          %s262 = smul.addr %s261, 4
          %s263 = scalar_lea.vmem %s0, %s262
        $region48: #{tpu_custom_call.1} parent=43 // pred_fallthru
          _
      $region44: #{tpu_custom_call.1} parent=5 // pred_fallthru
        _
      %p264 = scmp.le.s32.totalorder 1, %s17
      %p265 = scmp.lt.s32.totalorder %s17, 3
      %p266 = pnand %p264, %p265
      %p267 = pneg %p266
      // Predicated region
      $region49: #{tpu_custom_call.1} parent=5 // pred_check
        _
      $region50: #{tpu_custom_call.1} parent=5 // pred_check_branch
        %269 = sbr.rel (%p266) target = $region52
      $region51: #{tpu_custom_call.1} parent=5 // pred_region
        %s270 = ssub.s32 %s17, 1
        %p271 = scmp.lt.s32.totalorder %s22, 1
        %s272 = scalar_select %p271, %s22, 1
        %s273 = smul.addr %s272, 2
        %s274 = smul.addr %s273, 4
        %s275 = scalar_lea.vmem %s0, %s274
        %p276 = pneg %p43
        %p277 = pneg %p40
        %p278 = pneg %p64
        %p279 = pneg %p61
        %p280 = pneg %p85
        %p281 = pneg %p82
        %p282 = pneg %p106
        %p283 = pneg %p103
        %p284 = pneg %p127
        %p285 = pneg %p124
        %p286 = pneg %p148
        %p287 = pneg %p145
        %p288 = pneg %p169
        %p289 = pneg %p166
        %p290 = pneg %p190
        %p291 = pneg %p187
        %p292 = pneg %p216
        %p293 = pneg %p213
        %s294 = sand.u32 %s203, 1
        %s295 = scalar_lea.sflag [#allocation4], %s294
        %s296 = sand.u32 %s203, 1
        %s297 = smul.addr %s296, 8
        %s298 = scalar_lea.vmem [#allocation3], %s297
        %p299 = scmp.lt.s32.totalorder %s22, 1
        %s300 = scalar_select %p299, %s22, 1
        %s301 = smul.addr %s300, 2
        %s302 = smul.addr %s301, 4
        %s303 = scalar_lea.vmem %s0, %s302
        %v304 = vld [vmem:[%s303] sm:$0xff]
        %v305 = vld [vmem:[%s1] sm:$0xff]
        %v306 = vld [vmem:[%s2] sm:$0xff]
        %308 = vset.pattern.permute.xlu0 0
        %309 = vperm.xlu0 %308, %v306
        %v310 = vpop.permute.xlu0 %309
        %313 = vst [vmem:[#allocation1] ss:$2 sm:$0xff] %v304
        %v314 = vld.sshfl [vmem:[#allocation1] sm:$0xff pattern:$0x75316420]
        %v315 = vld.sshfl [vmem:[#allocation1 + $0x8] sm:$0xff pattern:$0x75316420]
        %vm316 = vcmask 31744
        %v318 = vsel %vm316, %v305, 0
        %vm320 = vcmask 1043456
        %v321 = vsel %vm320, %v314, 0
        %v323 = vsel %vm320, %v315, 0
        %325 = vmatpush.msra.mxu0 0.0
        %326 = vmatpush.msra.mxu0 0.0
        %327 = vmatpush.msra.mxu0 0.0
        %328 = vmatpush.msra.mxu0 0.0
        %329 = vmatpush.msra.mxu0 0.0
        %330 = vmatpush.msra.mxu0 0.0
        %331 = vmatpush.msra.mxu0 0.0
        %332 = vmatpush.msra.mxu0 0.0
        %333 = vmatpush.msra.mxu0 0.0
        %334 = vmatpush.msra.mxu0 0.0
        %335 = vmatpush.msra.mxu0 0.0
        %336 = vmatpush.msra.mxu0 0.0
        %337 = vmatpush.msra.mxu0 0.0
        %338 = vmatpush.msra.mxu0 0.0
        %339 = vmatpush.msra.mxu0 0.0
        %340 = vmatpush.msra.mxu0 %v321
        %341 = vmatmul.f32.gmra.mxu0 %v318
        %v342 = vpop.f32.mrf.mxu0
        %v343 = vadd.f32 %v310, %v342
        %344 = vdwg.mxu0
        %345 = vmatpush.msra.mxu0 0.0
        %346 = vmatpush.msra.mxu0 0.0
        %347 = vmatpush.msra.mxu0 0.0
        %348 = vmatpush.msra.mxu0 0.0
        %349 = vmatpush.msra.mxu0 0.0
        %350 = vmatpush.msra.mxu0 0.0
        %351 = vmatpush.msra.mxu0 0.0
        %352 = vmatpush.msra.mxu0 0.0
        %353 = vmatpush.msra.mxu0 0.0
        %354 = vmatpush.msra.mxu0 0.0
        %355 = vmatpush.msra.mxu0 0.0
        %356 = vmatpush.msra.mxu0 0.0
        %357 = vmatpush.msra.mxu0 0.0
        %358 = vmatpush.msra.mxu0 0.0
        %359 = vmatpush.msra.mxu0 0.0
        %360 = vmatpush.msra.mxu0 %v323
        %361 = vmatmul.f32.gmra.mxu0 %v318
        %v362 = vpop.f32.mrf.mxu0
        %v363 = vadd.f32 %v310, %v362
        %364 = vdwg.mxu0
        %v365 = vmax.f32 %v343, 0.0
        %v366 = vmax.f32 %v363, 0.0
        %v367 = vmin.f32 %v365, 6.0
        %v368 = vmin.f32 %v366, 6.0
        %vm369 = vcmask 1048440
        %370 = vst.msk [vmem:[#allocation2] sm:$0xff] %vm369, 0.0
        %vm371 = vcmask 138240
        %372 = vst.msk [vmem:[#allocation2 + $0x18] sm:$0xff] %vm371, 0.0
        %373 = vst [vmem:[#allocation2 + $0x8] sm:$0xff] %v367
        %374 = vst [vmem:[#allocation2 + $0x10] sm:$0xff] %v368
        %v375 = vld [vmem:[#allocation2] sm:$0xff]
        %v376 = vld [vmem:[#allocation2 + $0x8] sm:$0xff]
        %v377 = vld [vmem:[#allocation2 + $0x10] sm:$0xff]
        %v378 = vld [vmem:[%s3] sm:$0xff]
        %380 = vset.pattern.permute.xlu0 0
        %381 = vperm.xlu0 %380, %v378
        %v382 = vpop.permute.xlu0 %381
        %v384 = vmul.f32 %v382, %v375
        %v385 = vmul.f32 %v382, %v376
        %v386 = vmul.f32 %v382, %v377
        %387 = vset.pattern.permute.xlu0 3
        %388 = vperm.xlu0 %387, %v378
        %v389 = vpop.permute.xlu0 %388
        %v391 = vmul.f32 %v389, %v375
        %v392 = vmul.f32 %v389, %v376
        %v393 = vmul.f32 %v389, %v377
        %397 = vrot.lane.b32.xlu0 %v391, 112
        %v398 = vpop.permute.xlu0 %397
        %399 = vrot.lane.b32.xlu0 %v392, 112
        %v400 = vpop.permute.xlu0 %399
        %401 = vrot.lane.b32.xlu0 %v393, 112
        %v402 = vpop.permute.xlu0 %401
        %vm403 = vcmask 916480
        %v404 = vsel %vm403, %v398, %v400
        %v405 = vsel %vm403, %v400, %v402
        %v409 = vadd.f32 %v384, %v404
        %v410 = vadd.f32 %v385, %v405
        %v411 = vadd.f32 %v386, %v402
        %v412 = vld [vmem:[#allocation2 + $0x8] sm:$0xff]
        %v413 = vld [vmem:[#allocation2 + $0x10] sm:$0xff]
        %v414 = vld [vmem:[#allocation2 + $0x18] sm:$0xff]
        %415 = vset.pattern.permute.xlu0 6
        %416 = vperm.xlu0 %415, %v378
        %v417 = vpop.permute.xlu0 %416
        %v419 = vmul.f32 %v417, %v412
        %v420 = vmul.f32 %v417, %v413
        %v421 = vmul.f32 %v417, %v414
        %425 = vrot.lane.b32.xlu0 %v419, 96
        %v426 = vpop.permute.xlu0 %425
        %427 = vrot.lane.b32.xlu0 %v420, 96
        %v428 = vpop.permute.xlu0 %427
        %429 = vrot.lane.b32.xlu0 %v421, 96
        %v430 = vpop.permute.xlu0 %429
        %vm431 = vcmask 785408
        %v432 = vsel %vm431, %v426, %v428
        %v433 = vsel %vm431, %v428, %v430
        %v437 = vadd.f32 %v409, %v426
        %v438 = vadd.f32 %v410, %v432
        %v439 = vadd.f32 %v411, %v433
        %v440 = vld [vmem:[%s5] ss:$2 sm:$0x3]
        %v442 = vperm.slane %v440, 0
        %v443 = vperm.slane %v440, 1
        %449 = vrot.lane.b32.xlu0 %v437, 17
        %v450 = vpop.permute.xlu0 %449
        %451 = vrot.lane.b32.xlu0 %v438, 17
        %v452 = vpop.permute.xlu0 %451
        %453 = vrot.lane.b32.xlu0 %v439, 17
        %v454 = vpop.permute.xlu0 %453
        %v455 = vsel %vm371, %v450, %v452
        %v456 = vsel %vm371, %v452, %v454
        %v459 = vmul.f32 %v442, %v455
        %v460 = vmul.f32 %v443, %v456
        %461 = vset.pattern.permute.xlu0 1
        %462 = vperm.xlu0 %461, %v378
        %v463 = vpop.permute.xlu0 %462
        %v465 = vmul.f32 %v463, %v375
        %v466 = vmul.f32 %v463, %v376
        %v467 = vmul.f32 %v463, %v377
        %468 = vset.pattern.permute.xlu0 4
        %469 = vperm.xlu0 %468, %v378
        %v470 = vpop.permute.xlu0 %469
        %v472 = vmul.f32 %v470, %v376
        %v473 = vmul.f32 %v470, %v377
        %476 = vrot.lane.b32.xlu0 %v472, 112
        %v477 = vpop.permute.xlu0 %476
        %478 = vrot.lane.b32.xlu0 %v473, 112
        %v479 = vpop.permute.xlu0 %478
        %v480 = vsel %vm403, %v477, %v479
        %v484 = vadd.f32 %v465, %v477
        %v485 = vadd.f32 %v466, %v480
        %v486 = vadd.f32 %v467, %v479
        %487 = vset.pattern.permute.xlu0 7
        %488 = vperm.xlu0 %487, %v378
        %v489 = vpop.permute.xlu0 %488
        %v491 = vmul.f32 %v489, %v412
        %v492 = vmul.f32 %v489, %v413
        %v493 = vmul.f32 %v489, %v414
        %497 = vrot.lane.b32.xlu0 %v491, 96
        %v498 = vpop.permute.xlu0 %497
        %499 = vrot.lane.b32.xlu0 %v492, 96
        %v500 = vpop.permute.xlu0 %499
        %501 = vrot.lane.b32.xlu0 %v493, 96
        %v502 = vpop.permute.xlu0 %501
        %v503 = vsel %vm431, %v498, %v500
        %v504 = vsel %vm431, %v500, %v502
        %v508 = vadd.f32 %v484, %v498
        %v509 = vadd.f32 %v485, %v503
        %v510 = vadd.f32 %v486, %v504
        %514 = vrot.lane.b32.xlu0 %v508, 16
        %v515 = vpop.permute.xlu0 %514
        %516 = vrot.lane.b32.xlu0 %v509, 16
        %v517 = vpop.permute.xlu0 %516
        %518 = vrot.lane.b32.xlu0 %v510, 16
        %v519 = vpop.permute.xlu0 %518
        %vm520 = vcmask 130048
        %v521 = vsel %vm520, %v515, %v517
        %v522 = vsel %vm520, %v517, %v519
        %v525 = vadd.f32 %v459, %v521
        %v526 = vadd.f32 %v460, %v522
        %527 = vset.pattern.permute.xlu0 2
        %528 = vperm.xlu0 %527, %v378
        %v529 = vpop.permute.xlu0 %528
        %v531 = vmul.f32 %v529, %v375
        %v532 = vmul.f32 %v529, %v376
        %v533 = vmul.f32 %v529, %v377
        %534 = vset.pattern.permute.xlu0 5
        %535 = vperm.xlu0 %534, %v378
        %v536 = vpop.permute.xlu0 %535
        %v538 = vmul.f32 %v536, %v412
        %v539 = vmul.f32 %v536, %v413
        %v540 = vmul.f32 %v536, %v414
        %544 = vrot.lane.b32.xlu0 %v538, 112
        %v545 = vpop.permute.xlu0 %544
        %546 = vrot.lane.b32.xlu0 %v539, 112
        %v547 = vpop.permute.xlu0 %546
        %548 = vrot.lane.b32.xlu0 %v540, 112
        %v549 = vpop.permute.xlu0 %548
        %v550 = vsel %vm403, %v545, %v547
        %v551 = vsel %vm403, %v547, %v549
        %v555 = vadd.f32 %v531, %v545
        %v556 = vadd.f32 %v532, %v550
        %v557 = vadd.f32 %v533, %v551
        %558 = vset.pattern.permute.xlu0 8
        %559 = vperm.xlu0 %558, %v378
        %v560 = vpop.permute.xlu0 %559
        %v562 = vmul.f32 %v560, %v412
        %v563 = vmul.f32 %v560, %v413
        %v564 = vmul.f32 %v560, %v414
        %568 = vrot.lane.b32.xlu0 %v562, 96
        %v569 = vpop.permute.xlu0 %568
        %570 = vrot.lane.b32.xlu0 %v563, 96
        %v571 = vpop.permute.xlu0 %570
        %572 = vrot.lane.b32.xlu0 %v564, 96
        %v573 = vpop.permute.xlu0 %572
        %v574 = vsel %vm431, %v569, %v571
        %v575 = vsel %vm431, %v571, %v573
        %v579 = vadd.f32 %v555, %v569
        %v580 = vadd.f32 %v556, %v574
        %v581 = vadd.f32 %v557, %v575
        %s582 = scalar_lea.vmem %s5, 1
        %v583 = vld [vmem:[%s582] ss:$2 sm:$0x3]
        %v585 = vperm.slane %v583, 0
        %v586 = vperm.slane %v583, 1
        %592 = vrot.lane.b32.xlu0 %v579, 15
        %v593 = vpop.permute.xlu0 %592
        %594 = vrot.lane.b32.xlu0 %v580, 15
        %v595 = vpop.permute.xlu0 %594
        %596 = vrot.lane.b32.xlu0 %v581, 15
        %v597 = vpop.permute.xlu0 %596
        %vm598 = vcmask 121856
        %v599 = vsel %vm598, %v593, %v595
        %v600 = vsel %vm598, %v595, %v597
        %v603 = vmul.f32 %v585, %v599
        %v604 = vmul.f32 %v586, %v600
        %v605 = vadd.f32 %v525, %v603
        %v606 = vadd.f32 %v526, %v604
        %v607 = vld [vmem:[%s4] sm:$0xff]
        %609 = vset.pattern.permute.xlu0 0
        %610 = vperm.xlu0 %609, %v607
        %v611 = vpop.permute.xlu0 %610
        %v613 = vadd.f32 %v605, %v611
        %v614 = vadd.f32 %v606, %v611
        %v615 = vmax.f32 %v613, 0.0
        %v616 = vmax.f32 %v614, 0.0
        %v617 = vmin.f32 %v615, 6.0
        %v618 = vmin.f32 %v616, 6.0
        %v619 = vld [vmem:[%s6] sm:$0xf]
        %v620 = vld [vmem:[%s7] sm:$0xf]
        %622 = vset.pattern.permute.xlu0 0
        %623 = vperm.xlu0 %622, %v620
        %v624 = vpop.permute.xlu0 %623
        %vm626 = vcmask 64512
        %v628 = vsel %vm626, %v619, 0
        %630 = vmatpush.msra.mxu0 0.0
        %631 = vmatpush.msra.mxu0 0.0
        %632 = vmatpush.msra.mxu0 0.0
        %633 = vmatpush.msra.mxu0 0.0
        %634 = vmatpush.msra.mxu0 0.0
        %635 = vmatpush.msra.mxu0 0.0
        %636 = vmatpush.msra.mxu0 0.0
        %637 = vmatpush.msra.mxu0 0.0
        %638 = vmatpush.msra.mxu0 0.0
        %639 = vmatpush.msra.mxu0 0.0
        %640 = vmatpush.msra.mxu0 0.0
        %641 = vmatpush.msra.mxu0 0.0
        %642 = vmatpush.msra.mxu0 0.0
        %643 = vmatpush.msra.mxu0 0.0
        %644 = vmatpush.msra.mxu0 0.0
        %645 = vmatpush.msra.mxu0 %v617
        %646 = vmatmul.f32.gmra.mxu0 %v628
        %v647 = vpop.f32.mrf.mxu0
        %v648 = vadd.f32 %v624, %v647
        %649 = vdwg.mxu0
        %650 = vmatpush.msra.mxu0 0.0
        %651 = vmatpush.msra.mxu0 0.0
        %652 = vmatpush.msra.mxu0 0.0
        %653 = vmatpush.msra.mxu0 0.0
        %654 = vmatpush.msra.mxu0 0.0
        %655 = vmatpush.msra.mxu0 0.0
        %656 = vmatpush.msra.mxu0 0.0
        %657 = vmatpush.msra.mxu0 0.0
        %658 = vmatpush.msra.mxu0 0.0
        %659 = vmatpush.msra.mxu0 0.0
        %660 = vmatpush.msra.mxu0 0.0
        %661 = vmatpush.msra.mxu0 0.0
        %662 = vmatpush.msra.mxu0 0.0
        %663 = vmatpush.msra.mxu0 0.0
        %664 = vmatpush.msra.mxu0 0.0
        %665 = vmatpush.msra.mxu0 %v618
        %666 = vmatmul.f32.gmra.mxu0 %v628
        %v667 = vpop.f32.mrf.mxu0
        %v668 = vadd.f32 %v624, %v667
        %669 = vdwg.mxu0
        %670 = vst [vmem:[#allocation1] ss:$2 sm:$0xff] %v304
        %v671 = vld.sshfl [vmem:[#allocation1] sm:$0xff pattern:$0x75316420]
        %v672 = vld.sshfl [vmem:[#allocation1 + $0x8] sm:$0xff pattern:$0x75316420]
        %v675 = vadd.f32 %v648, %v671
        %v676 = vadd.f32 %v668, %v672
        %v679 = vrot.slane %v676, 4
        %v680 = vsel %vm320, %v675, %v679
        %682 = vst [vmem:[%s298] sm:$0xff] %v680
        %s683 = sand.u32 %s203, 1
        %s684 = scalar_lea.sflag [#allocation4], %s683
        %s685 = sand.u32 %s203, 1
        %s686 = smul.addr %s685, 8
        %s687 = scalar_lea.vmem [#allocation3], %s686
        // Predicated region
        $region53: #{tpu_custom_call.1} parent=51 // pred_check
          %p688 = pneg %p213
        $region54: #{tpu_custom_call.1} parent=51 // pred_check_branch
          %690 = sbr.rel (%p688) target = $region56
        $region55: #{tpu_custom_call.1} parent=51 // pred_region
          %692 = vsyncadd %s684, 0
          %s693 = smul.addr %s22, 2
          %s694 = smul.addr %s693, 4
          %s695 = scalar_lea.hbm %s8, %s694
          %s697 = sshll.u32 %s687, 4
          %s698 = int_to_ptr.vmem [resolvable:$true] %s697
          %s699 = sshll.u32 %s695, 4
          %s700 = int_to_ptr.hbm [resolvable:$true] %s699
          %702 = dma.vmem_to_hbm [thread:$0]  %s698, 128, %s700, %s684
        $region56: #{tpu_custom_call.1} parent=51 // pred_fallthru
          _
      $region52: #{tpu_custom_call.1} parent=5 // pred_fallthru
        _
      %p703 = scmp.le.s32.totalorder 2, %s17
      // Predicated region
      $region57: #{tpu_custom_call.1} parent=5 // pred_check
        %p704 = pneg %p703
      $region58: #{tpu_custom_call.1} parent=5 // pred_check_branch
        %706 = sbr.rel (%p704) target = $region60
      $region59: #{tpu_custom_call.1} parent=5 // pred_region
        %s707 = ssub.s32 %s17, 2
        // Predicated region
        $region61: #{tpu_custom_call.1} parent=59 // pred_check
          %p708 = pneg %p219
        $region62: #{tpu_custom_call.1} parent=59 // pred_check_branch
          %710 = sbr.rel (%p708) target = $region64
        $region63: #{tpu_custom_call.1} parent=59 // pred_region
          %s711 = sand.u32 %s204, 1
          %s712 = scalar_lea.sflag [#allocation4], %s711
          %s713 = sand.u32 %s204, 1
          %s714 = smul.addr %s713, 8
          %s715 = scalar_lea.vmem [#allocation3], %s714
          %717 = dma.done %s712, 128
        $region64: #{tpu_custom_call.1} parent=59 // pred_fallthru
          _
      $region60: #{tpu_custom_call.1} parent=5 // pred_fallthru
        _
    $region6: #{tpu_custom_call.1} parent=1 // loop_footer
      %s21 = sadd.s32 1, %s17
    $region7: #{tpu_custom_call.1} parent=1 // loop_footer_branch
      %16 = sbr.rel target = $region3
    $region8: #{tpu_custom_call.1} parent=1 // loop_exit
      _
    %718 = vsyncpa [#allocation4], 1
    %s719 = scalar_lea.sflag [#allocation4], 1
    %720 = vsyncpa %s719, 1

</llo_original>
